<compile_context>
chip_gen: v6e
topology: v6e:2x2x1
jax: 0.10.0
libtpu: 0.0.40
codegen_flags: <defaults>
</compile_context>

<pallas_src>
import jax
import jax.numpy as jnp
from jax.experimental import pallas as pl
from jax.experimental.pallas import tpu as pltpu


_LANE_WIDTHS = (1024, 512, 256, 128)     # candidate lane-dense row widths
_SUBLANE_QUANTUM = 32                    # tile_rows rounding (covers f32/bf16/int8 packing)
_TILE_BYTES = 4 * 1024 * 1024            # target bytes per block (dtype-aware row count)
_MIN_GRID_STEPS = 4                      # pipelining overlap + v7x megacore sharding
_DEFAULT_MIN_PALLAS_BYTES = 4 * 1024 * 1024


def _hsigmoid_kernel(x_ref, o_ref):
    x = x_ref[...]
    # relu6(x + 3) / 6 == clip(x + 3, 0, 6) / 6.  Divide by 6.0 (not *1/6) to
    # match the PyTorch reference bit-for-bit; memory-bound, so it is hidden.
    o_ref[...] = (jnp.clip(x + 3.0, 0.0, 6.0) / 6.0).astype(o_ref.dtype)


@jax.jit
def _hsigmoid_xla(x):
    # Fused XLA path: tiny tensors and element counts not divisible by 128.
    return (jnp.clip(x + 3.0, 0.0, 6.0) / 6.0).astype(x.dtype)


def _round_up(n, m):
    return ((n + m - 1) // m) * m


@jax.jit
def _hsigmoid_pallas(x):
    orig_shape = x.shape
    dtype = x.dtype
    size = x.size
    itemsize = x.dtype.itemsize

    # Largest lane-dense width dividing the element count (caller guarantees
    # size % 128 == 0).  Reshape of a contiguous row-major array is free.
    lane = next(L for L in _LANE_WIDTHS if size % L == 0)
    rows = size // lane
    x2d = x.reshape(rows, lane)

    # Dtype-aware tile: ~_TILE_BYTES per block, but aim for >=_MIN_GRID_STEPS
    # blocks on large tensors so HBM read/write streams overlap and the
    # "parallel" axis can be sharded across TensorCores on v7x.
    max_tile_rows = max(_SUBLANE_QUANTUM, _TILE_BYTES // (lane * itemsize))
    want_rows = _round_up(pl.cdiv(rows, _MIN_GRID_STEPS), _SUBLANE_QUANTUM)
    tile_rows = min(max_tile_rows, want_rows)
    if tile_rows >= rows:
        tile_rows = rows                      # full extent: always legal
    grid = (pl.cdiv(rows, tile_rows),)        # Pallas masks the partial edge block

    cost = pl.CostEstimate(
        flops=3 * size,
        transcendentals=0,
        bytes_accessed=2 * size * itemsize,
    )

    out2d = pl.pallas_call(
        _hsigmoid_kernel,
        out_shape=jax.ShapeDtypeStruct((rows, lane), dtype),
        grid=grid,
        in_specs=[pl.BlockSpec((tile_rows, lane), lambda i: (i, 0))],
        out_specs=pl.BlockSpec((tile_rows, lane), lambda i: (i, 0)),
        compiler_params=pltpu.CompilerParams(
            dimension_semantics=("parallel",),   # 2 TCs on v7x; no-op on v5e/v6e
            vmem_limit_bytes=32 * 1024 * 1024,   # 4 MiB tile, dbl-buffered in+out
        ),
        cost_estimate=cost,
        # NOTE: callers that donate the activation can add
        # input_output_aliases={0: 0} here to reuse the input HBM buffer.
    )(x2d)

    return out2d.reshape(orig_shape)


def hsigmoid(x: jax.Array, *, min_pallas_bytes: int = _DEFAULT_MIN_PALLAS_BYTES) -> jax.Array:
    """Elementwise hard-sigmoid matching PyTorch F.relu6(x + 3) / 6."""
    size = x.size
    nbytes = size * x.dtype.itemsize
    if size == 0 or size % 128 != 0 or nbytes < min_pallas_bytes:
        # Non-multiple-of-128 sizes (rare for conv activations) and small
        # tensors: XLA's fused elementwise is already ~at the HBM roofline and
        # needs no pad/slice traffic.
        return _hsigmoid_xla(x)
    return _hsigmoid_pallas(x)


if __name__ == "__main__":
    key = jax.random.PRNGKey(0)

    def ref(v):
        return (jnp.clip(v + 3.0, 0.0, 6.0) / 6.0).astype(v.dtype)

    # 1) NCHW activation, size % 1024 == 0 -> lane width 1024 (aligned path).
    x1 = jax.random.normal(key, (2, 4, 16, 16), dtype=jnp.float32) * 4.0
    y1 = jax.block_until_ready(hsigmoid(x1, min_pallas_bytes=0))
    assert y1.shape == x1.shape and y1.dtype == x1.dtype
    assert jnp.allclose(y1, ref(x1), atol=1e-6), "mismatch vs reference (f32, L=1024)"

    # 2) MobileNet-style (2, 96, 14, 14): size % 1024 != 0 but % 256 == 0 ->
    #    lane width 256, multiple grid steps, masked partial edge block.
    x2 = jax.random.normal(jax.random.PRNGKey(1), (2, 96, 14, 14), dtype=jnp.float32) * 4.0
    y2 = jax.block_until_ready(hsigmoid(x2, min_pallas_bytes=0))
    assert y2.shape == x2.shape
    assert jnp.allclose(y2, ref(x2), atol=1e-6), "mismatch vs reference (f32, L=256)"

    # 3) Size not divisible by 128 -> fused XLA fallback (no pad/slice anywhere).
    x3 = jax.random.normal(jax.random.PRNGKey(2), (3, 5, 7, 11), dtype=jnp.float32)
    y3 = jax.block_until_ready(hsigmoid(x3, min_pallas_bytes=0))
    assert y3.shape == x3.shape
    assert jnp.allclose(y3, ref(x3), atol=1e-6), "mismatch vs reference (fallback)"

    # 4) bf16 end-to-end (no f32 upcast at the HBM boundary).
    x4 = x1.astype(jnp.bfloat16)
    y4 = jax.block_until_ready(hsigmoid(x4, min_pallas_bytes=0))
    assert y4.dtype == jnp.bfloat16
    assert jnp.allclose(y4.astype(jnp.float32), ref(x4).astype(jnp.float32),
                        atol=1e-2), "mismatch vs reference (bf16)"

    print("KERNEL_OK")
</pallas_src>

<mosaic_0001>
module attributes {stable_mosaic.version = 11 : i64} {
  func.func @_hsigmoid_kernel(%arg0: i32, %arg1: memref<2x1024xf32, #tpu.memory_space<vmem>>, %arg2: memref<2x1024xf32, #tpu.memory_space<vmem>>) attributes {dimension_semantics = [#tpu.dimension_semantics<parallel>], iteration_bounds = array<i64: 1>, scalar_prefetch = 0 : i64, scratch_operands = 0 : i64, tpu.core_type = #tpu.core_type<tc>, window_params = [{transform_indices = @transform_0, window_bounds = array<i64: 2, 1024>}, {transform_indices = @transform_1, window_bounds = array<i64: 2, 1024>}]} {
    %c0 = arith.constant 0 : index
    %c0_0 = arith.constant 0 : index
    %0 = vector.load %arg1[%c0, %c0_0] : memref<2x1024xf32, #tpu.memory_space<vmem>>, vector<2x1024xf32>
    %cst = arith.constant 3.000000e+00 : f32
    %1 = vector.broadcast %cst : f32 to vector<2x1024xf32>
    %2 = arith.addf %0, %1 : vector<2x1024xf32>
    %cst_1 = arith.constant 0.000000e+00 : f32
    %cst_2 = arith.constant 6.000000e+00 : f32
    %3 = vector.broadcast %cst_1 : f32 to vector<2x1024xf32>
    %4 = arith.maximumf %3, %2 : vector<2x1024xf32>
    %5 = vector.broadcast %cst_2 : f32 to vector<2x1024xf32>
    %6 = arith.minimumf %5, %4 : vector<2x1024xf32>
    %cst_3 = arith.constant 6.000000e+00 : f32
    %7 = vector.broadcast %cst_3 : f32 to vector<2x1024xf32>
    %8 = arith.divf %6, %7 : vector<2x1024xf32>
    %c0_4 = arith.constant 0 : index
    %c0_5 = arith.constant 0 : index
    %9 = vector.load %arg2[%c0_4, %c0_5] : memref<2x1024xf32, #tpu.memory_space<vmem>>, vector<2x1024xf32>
    tpu.vector_store %arg2[%c0_4, %c0_5], %8 {strides = array<i32>} : memref<2x1024xf32, #tpu.memory_space<vmem>>, vector<2x1024xf32>,
    return
  }
  func.func @transform_0(%arg0: i32) -> (i32, i32) {
    %c0_i32 = arith.constant 0 : i32
    %c0_i32_0 = arith.constant 0 : i32
    return %arg0, %c0_i32 : i32, i32
  }
  func.func @transform_1(%arg0: i32) -> (i32, i32) {
    %c0_i32 = arith.constant 0 : i32
    %c0_i32_0 = arith.constant 0 : i32
    return %arg0, %c0_i32 : i32, i32
  }
}

</mosaic_0001>

<llo_original>
// kernel: _hsigmoid_pallas.1
$region0: #{_hsigmoid_pallas.1}
  #allocation0 [shape = 'u32[]', space=smem, size = 0x4, offset = 0x4, fixed_abs, tag = 'smem constant byte address 0x4 - core index']
  #allocation1 [shape = 'u32[144,128]{1,0:T(1,128)}', space=vmem, size = 0x12000, scoped, tag = 'internal scratch']
  %s0 = inlined_call_operand.vmem [shape: f32[2,1024], index: 0, kind: input, shape index: {}]
  %s1 = inlined_call_operand.vmem [shape: f32[2,1024], index: 1, kind: output, shape index: {}]
  %s2 = sld [smem:[#allocation0]]
  $region14: #{_hsigmoid_pallas.1} parent=0
    _
  %s4 = ssub.s32 1, %s2
  %s5 = scalar_select 0, %s4, %s2
  // Predicated region
  $region2: #{_hsigmoid_pallas.1} parent=0 // pred_check
    _
  $region3: #{_hsigmoid_pallas.1} parent=0 // pred_check_branch
    %7 = sbr.rel (0) target = $region5
  $region4: #{_hsigmoid_pallas.1} parent=0 // pred_region
    _
  $region5: #{_hsigmoid_pallas.1} parent=0 // pred_fallthru
    _
  %v8 = vld [vmem:[%s0] sm:$0xff]
  %v9 = vld [vmem:[%s0 + $0x8] sm:$0xff]
  %v10 = vadd.f32 %v8, 3.0
  %v11 = vadd.f32 %v9, 3.0
  %v12 = vmax.f32 %v10, 0.0
  %v13 = vmax.f32 %v11, 0.0
  %v14 = vmin.f32 %v12, 6.0
  %v15 = vmin.f32 %v13, 6.0
  %v16 = vrcp.pop 6.0
  %v17 = vmul.f32 %v14, %v16
  %v18 = vmul.f32 %v15, %v16
  %19 = vst [vmem:[%s1] sm:$0xff] %v17
  %20 = vst [vmem:[%s1 + $0x8] sm:$0xff] %v18
  // Predicated region
  $region6: #{_hsigmoid_pallas.1} parent=0 // pred_check
    _
  $region7: #{_hsigmoid_pallas.1} parent=0 // pred_check_branch
    %22 = sbr.rel (0) target = $region9
  $region8: #{_hsigmoid_pallas.1} parent=0 // pred_region
    _
  $region9: #{_hsigmoid_pallas.1} parent=0 // pred_fallthru
    _
  // Predicated region
  $region10: #{_hsigmoid_pallas.1} parent=0 // pred_check
    _
  $region11: #{_hsigmoid_pallas.1} parent=0 // pred_check_branch
    %24 = sbr.rel (0) target = $region13
  $region12: #{_hsigmoid_pallas.1} parent=0 // pred_region
    _
  $region13: #{_hsigmoid_pallas.1} parent=0 // pred_fallthru
    _

</llo_original>
